<compile_context>
chip_gen: v7x
topology: tpu7x:2x2x1
jax: 0.10.0
libtpu: 0.0.40
codegen_flags: <defaults>
</compile_context>

<pallas_src>
import jax
import jax.numpy as jnp
from jax.experimental import pallas as pl
from jax.experimental.pallas import tpu as pltpu


def _round_up(v, m):
    return (v + m - 1) // m * m


# ----------------------------- Pallas kernels ------------------------------ #

def _avgpool_kernel(x_ref, o_ref):
    # x_ref: (TM, 2, Wo, 2*Do) -- rows indexed by (h-parity, wo, w-parity*Do+do),
    #        the d-parity pair is already folded by the wrapper.
    # o_ref: (TM, Wo, Do)
    do = o_ref.shape[-1]
    t = x_ref[...].astype(jnp.float32)
    s = t[:, 0] + t[:, 1]                    # pool the H pair          (TM, Wo, 2*Do)
    s = s[:, :, :do] + s[:, :, do:]          # pool the W pair (contiguous lane halves)
    o_ref[...] = (s * 0.125).astype(o_ref.dtype)


def _conv_kernel(lo_ref, hi_ref, w_ref, b_ref, o_ref):
    # lo_ref/hi_ref: (2, 4, Wo+1, Dop+1, Cin) -- input H rows 2ho..2ho+1 and
    #   2ho+2..2ho+3 of one batch element, with W/D split as (block, parity)
    #   and the two parity bits folded into dim 1.
    # w_ref: (27, Cin, Nco)  tap-major weights (VMEM resident across the grid)
    # b_ref: (1, Nco)
    # o_ref: (1, Wo*Dop, Nco)
    wo = lo_ref.shape[2] - 1
    dop = lo_ref.shape[3] - 1
    cin = lo_ref.shape[4]
    nco = o_ref.shape[2]

    acc = jnp.zeros((wo * dop, nco), jnp.float32)
    for kh in range(3):
        src = lo_ref if kh < 2 else hi_ref
        hrow = kh if kh < 2 else 0
        for kw in range(3):
            pw, sw = kw % 2, kw // 2
            for kd in range(3):
                pd, sd = kd % 2, kd // 2
                # (Wo, Dop, Cin) patch slab: integer indices + contiguous
                # slices only (no strided gathers); Dop is a multiple of 8 so
                # the collapse to (Wo*Dop, Cin) is sublane-aligned.
                slab = src[hrow, 2 * pw + pd, sw:sw + wo, sd:sd + dop, :]
                slab = slab.reshape(wo * dop, cin).astype(jnp.float32)
                tap = (kh * 3 + kw) * 3 + kd
                acc = acc + jnp.dot(slab, w_ref[tap].astype(jnp.float32),
                                    preferred_element_type=jnp.float32)
    acc = acc + b_ref[...].astype(jnp.float32)
    o_ref[0] = acc.astype(o_ref.dtype)


# ------------------------------- Wrappers ----------------------------------- #

def downsample_avgpool(x, *, tm=512):
    """avg_pool3d(x, 2, stride=2): (B,C,H,W,D) -> (B,C,H//2,W//2,D//2)."""
    B, C, H, W, D = x.shape
    Ho, Wo, Do = H // 2, W // 2, D // 2
    x = x[:, :, :2 * Ho, :2 * Wo, :2 * Do]            # floor behavior of avg_pool3d
    # Fold the innermost (lane-dim) pooling pair with one fused XLA pass
    # (read N, write N/2).  No transposes / tap stacks are materialized.
    xd = x[..., 0::2] + x[..., 1::2]                  # (B, C, 2Ho, 2Wo, Do)
    M = B * C * Ho
    xr = xd.reshape(M, 2, Wo, 2 * Do)                 # free reshape

    tm = max(1, min(tm, M))
    out = pl.pallas_call(
        _avgpool_kernel,
        out_shape=jax.ShapeDtypeStruct((M, Wo, Do), x.dtype),
        grid_spec=pltpu.PrefetchScalarGridSpec(
            num_scalar_prefetch=0,
            grid=(pl.cdiv(M, tm),),
            in_specs=[pl.BlockSpec((tm, 2, Wo, 2 * Do), lambda i: (i, 0, 0, 0))],
            out_specs=pl.BlockSpec((tm, Wo, Do), lambda i: (i, 0, 0)),
        ),
        compiler_params=pltpu.CompilerParams(
            dimension_semantics=("parallel",),
            vmem_limit_bytes=32 * 1024 * 1024,
        ),
        cost_estimate=pl.CostEstimate(
            flops=4 * M * Wo * Do,
            transcendentals=0,
            bytes_accessed=(xr.size + M * Wo * Do) * x.dtype.itemsize,
        ),
    )(xr)
    return out.reshape(B, C, Ho, Wo, Do)


def downsample_conv(x, w, b):
    """F.pad(x,(0,1,0,1,0,1)) then Conv3d(k=3, stride=2, pad=0) + bias.

    x: (B, Cin, H, W, D); w: (Cout, Cin, 3, 3, 3); b: (Cout,)
    returns (B, Cout, H//2, W//2, D//2)
    """
    B, Cin, H, W, D = x.shape
    Cout = w.shape[0]
    Ho, Wo, Do = H // 2, W // 2, D // 2
    Dop = _round_up(Do, 8)          # sublane-aligned inner rows (extras sliced off)
    Nco = _round_up(Cout, 128)      # lane-dense output / MXU-width N
    Hp, Wp, Dp = 2 * Ho + 2, 2 * (Wo + 1), 2 * (Dop + 1)

    # One channels-last relayout + high-side zero pad (covers F.pad(...,(0,1))
    # plus halo/alignment padding; the extra zeros never reach valid outputs).
    xl = jnp.transpose(x, (0, 2, 3, 4, 1))                              # (B,H,W,D,Cin)
    xp = jnp.pad(xl, ((0, 0), (0, Hp - H), (0, Wp - W), (0, Dp - D), (0, 0)))
    # Split W/D into (block, parity) and bring the two parity bits together so
    # the kernel addresses every tap with integer indices + contiguous slices.
    xq = jnp.transpose(xp.reshape(B, Hp, Wo + 1, 2, Dop + 1, 2, Cin),
                       (0, 1, 3, 5, 2, 4, 6))
    xq = xq.reshape(B * Hp, 4, Wo + 1, Dop + 1, Cin)

    # weights (Cout,Cin,3,3,3) -> tap-major (27, Cin, Nco); bias -> (1, Nco)
    w2 = jnp.transpose(w, (2, 3, 4, 1, 0)).reshape(27, Cin, Cout)
    w2 = jnp.pad(w2, ((0, 0), (0, 0), (0, Nco - Cout)))
    b2 = jnp.pad(b, (0, Nco - Cout)).reshape(1, Nco)

    rowblk = (2, 4, Wo + 1, Dop + 1, Cin)

    out = pl.pallas_call(
        _conv_kernel,
        out_shape=jax.ShapeDtypeStruct((B * Ho, Wo * Dop, Nco), x.dtype),
        grid_spec=pltpu.PrefetchScalarGridSpec(
            num_scalar_prefetch=0,
            grid=(B, Ho),
            in_specs=[
                # input H rows 2ho, 2ho+1 of batch bb (Hp = 2*(Ho+1) rows/batch)
                pl.BlockSpec(rowblk, lambda bb, ho: (bb * (Ho + 1) + ho, 0, 0, 0, 0)),
                # input H rows 2ho+2, 2ho+3 (halo rows for the kh==2 taps)
                pl.BlockSpec(rowblk, lambda bb, ho: (bb * (Ho + 1) + ho + 1, 0, 0, 0, 0)),
                pl.BlockSpec((27, Cin, Nco), lambda bb, ho: (0, 0, 0)),   # resident weights
                pl.BlockSpec((1, Nco), lambda bb, ho: (0, 0)),            # resident bias
            ],
            out_specs=pl.BlockSpec((1, Wo * Dop, Nco),
                                   lambda bb, ho: (bb * Ho + ho, 0, 0)),
        ),
        compiler_params=pltpu.CompilerParams(
            dimension_semantics=("parallel", "parallel"),
            vmem_limit_bytes=32 * 1024 * 1024,
        ),
        cost_estimate=pl.CostEstimate(
            flops=2 * B * Ho * Wo * Dop * 27 * Cin * Nco,
            transcendentals=0,
            bytes_accessed=(2 * xq.size + w2.size
                            + B * Ho * Wo * Dop * Nco) * x.dtype.itemsize,
        ),
    )(xq, xq, w2, b2)

    out = out.reshape(B, Ho, Wo, Dop, Nco)[:, :, :, :Do, :Cout]
    return jnp.transpose(out, (0, 4, 1, 2, 3))


def downsample(x, *, with_conv=False, fir=False, conv_weight=None, conv_bias=None):
    """Mirror of Downsample.forward for the fir=False configurations."""
    if fir:
        # TODO(synk): FIR (upfirdn3d) downsample / FIR Conv3d paths not implemented.
        raise NotImplementedError("fir=True path not implemented")
    if with_conv:
        return downsample_conv(x, conv_weight, conv_bias)
    return downsample_avgpool(x)


# --------------------------------- Main ------------------------------------- #

if __name__ == "__main__":
    key = jax.random.PRNGKey(0)
    kx, kw, kb = jax.random.split(key, 3)

    B, Cin, H, W, D = 2, 4, 8, 8, 8
    Cout = 4
    x = jax.random.normal(kx, (B, Cin, H, W, D), dtype=jnp.float32)

    # --- default config: with_conv=False, fir=False  (avg_pool3d) ---
    y_pool = jax.block_until_ready(downsample(x, with_conv=False, fir=False))
    ref_pool = x.reshape(B, Cin, H // 2, 2, W // 2, 2, D // 2, 2).mean(axis=(3, 5, 7))
    assert y_pool.shape == (B, Cin, H // 2, W // 2, D // 2)
    assert jnp.max(jnp.abs(y_pool - ref_pool)) < 1e-5, "avgpool mismatch"

    # --- with_conv=True, fir=False  (pad + 3x3x3 stride-2 conv) ---
    conv_w = 0.05 * jax.random.normal(kw, (Cout, Cin, 3, 3, 3), dtype=jnp.float32)
    conv_b = 0.1 * jax.random.normal(kb, (Cout,), dtype=jnp.float32)
    y_conv = jax.block_until_ready(
        downsample(x, with_conv=True, fir=False, conv_weight=conv_w, conv_bias=conv_b))

    xp_ref = jnp.pad(x, ((0, 0), (0, 0), (0, 1), (0, 1), (0, 1)))
    ref_conv = jax.lax.conv_general_dilated(
        xp_ref, conv_w, window_strides=(2, 2, 2), padding="VALID",
        dimension_numbers=("NCDHW", "OIDHW", "NCDHW"),
    ) + conv_b.reshape(1, -1, 1, 1, 1)
    assert y_conv.shape == (B, Cout, H // 2, W // 2, D // 2)
    assert jnp.max(jnp.abs(y_conv - ref_conv)) < 2e-2, "conv mismatch"

    print("KERNEL_OK")
</pallas_src>

<mosaic_0001>
module attributes {stable_mosaic.version = 11 : i64} {
  func.func @_avgpool_kernel(%arg0: i32, %arg1: memref<32x2x4x8xf32, #tpu.memory_space<vmem>>, %arg2: memref<32x4x4xf32, #tpu.memory_space<vmem>>) attributes {dimension_semantics = [#tpu.dimension_semantics<parallel>], iteration_bounds = array<i64: 1>, scalar_prefetch = 0 : i64, scratch_operands = 0 : i64, tpu.core_type = #tpu.core_type<tc>, window_params = [{transform_indices = @transform_0, window_bounds = array<i64: 32, 2, 4, 8>}, {transform_indices = @transform_1, window_bounds = array<i64: 32, 4, 4>}]} {
    %c0 = arith.constant 0 : index
    %c0_0 = arith.constant 0 : index
    %c0_1 = arith.constant 0 : index
    %c0_2 = arith.constant 0 : index
    %0 = vector.load %arg1[%c0, %c0_0, %c0_1, %c0_2] : memref<32x2x4x8xf32, #tpu.memory_space<vmem>>, vector<32x2x4x8xf32>
    %1 = vector.extract_strided_slice %0 {offsets = [0, 0, 0, 0], sizes = [32, 1, 4, 8], strides = [1, 1, 1, 1]} : vector<32x2x4x8xf32> to vector<32x1x4x8xf32>
    %2 = vector.shape_cast %1 : vector<32x1x4x8xf32> to vector<32x4x8xf32>
    %3 = vector.extract_strided_slice %0 {offsets = [0, 1, 0, 0], sizes = [32, 1, 4, 8], strides = [1, 1, 1, 1]} : vector<32x2x4x8xf32> to vector<32x1x4x8xf32>
    %4 = vector.shape_cast %3 : vector<32x1x4x8xf32> to vector<32x4x8xf32>
    %5 = arith.addf %2, %4 : vector<32x4x8xf32>
    %6 = vector.extract_strided_slice %5 {offsets = [0, 0, 0], sizes = [32, 4, 4], strides = [1, 1, 1]} : vector<32x4x8xf32> to vector<32x4x4xf32>
    %7 = vector.extract_strided_slice %5 {offsets = [0, 0, 4], sizes = [32, 4, 4], strides = [1, 1, 1]} : vector<32x4x8xf32> to vector<32x4x4xf32>
    %8 = arith.addf %6, %7 : vector<32x4x4xf32>
    %cst = arith.constant 1.250000e-01 : f32
    %9 = vector.broadcast %cst : f32 to vector<32x4x4xf32>
    %10 = arith.mulf %8, %9 : vector<32x4x4xf32>
    %c0_3 = arith.constant 0 : index
    %c0_4 = arith.constant 0 : index
    %c0_5 = arith.constant 0 : index
    %11 = vector.load %arg2[%c0_3, %c0_4, %c0_5] : memref<32x4x4xf32, #tpu.memory_space<vmem>>, vector<32x4x4xf32>
    tpu.vector_store %arg2[%c0_3, %c0_4, %c0_5], %10 {strides = array<i32>} : memref<32x4x4xf32, #tpu.memory_space<vmem>>, vector<32x4x4xf32>,
    return
  }
  func.func @transform_0(%arg0: i32) -> (i32, i32, i32, i32) {
    %c0_i32 = arith.constant 0 : i32
    %c0_i32_0 = arith.constant 0 : i32
    %c0_i32_1 = arith.constant 0 : i32
    %c0_i32_2 = arith.constant 0 : i32
    return %arg0, %c0_i32, %c0_i32_0, %c0_i32_1 : i32, i32, i32, i32
  }
  func.func @transform_1(%arg0: i32) -> (i32, i32, i32) {
    %c0_i32 = arith.constant 0 : i32
    %c0_i32_0 = arith.constant 0 : i32
    %c0_i32_1 = arith.constant 0 : i32
    return %arg0, %c0_i32, %c0_i32_0 : i32, i32, i32
  }
}

</mosaic_0001>

<llo_original>
// kernel: tpu_custom_call.1
$region0: #{tpu_custom_call.1}
  #allocation0 [shape = 'u32[]', space=smem, size = 0x4, offset = 0x4, fixed_abs, tag = 'smem constant byte address 0x4 - core index']
  #allocation1 [shape = 'u32[144,128]{1,0:T(1,128)}', space=vmem, size = 0x12000, scoped, tag = 'internal scratch']
  %s0 = inlined_call_operand.vmem [shape: f32[32,2,4,8], index: 0, kind: input, shape index: {}]
  %s1 = inlined_call_operand.vmem [shape: f32[32,4,4], index: 1, kind: output, shape index: {}]
  %s2 = sld [smem:[#allocation0]]
  $region14: #{tpu_custom_call.1} parent=0
    _
  %s4 = ssub.s32 1, %s2
  %s5 = scalar_select 0, %s4, %s2
  // Predicated region
  $region2: #{tpu_custom_call.1} parent=0 // pred_check
    _
  $region3: #{tpu_custom_call.1} parent=0 // pred_check_branch
    %7 = sbr.rel (0) target = $region5
  $region4: #{tpu_custom_call.1} parent=0 // pred_region
    _
  $region5: #{tpu_custom_call.1} parent=0 // pred_fallthru
    _
  %v8 = vld [vmem:[%s0] sm:$0xf]
  %v9 = vld [vmem:[%s0 + $0x4] sm:$0xf]
  %v10 = vld [vmem:[%s0 + $0x8] sm:$0xf]
  %v11 = vld [vmem:[%s0 + $0xc] sm:$0xf]
  %v12 = vld [vmem:[%s0 + $0x10] sm:$0xf]
  %v13 = vld [vmem:[%s0 + $0x14] sm:$0xf]
  %v14 = vld [vmem:[%s0 + $0x18] sm:$0xf]
  %v15 = vld [vmem:[%s0 + $0x1c] sm:$0xf]
  %v16 = vld [vmem:[%s0 + $0x20] sm:$0xf]
  %v17 = vld [vmem:[%s0 + $0x24] sm:$0xf]
  %v18 = vld [vmem:[%s0 + $0x28] sm:$0xf]
  %v19 = vld [vmem:[%s0 + $0x2c] sm:$0xf]
  %v20 = vld [vmem:[%s0 + $0x30] sm:$0xf]
  %v21 = vld [vmem:[%s0 + $0x34] sm:$0xf]
  %v22 = vld [vmem:[%s0 + $0x38] sm:$0xf]
  %v23 = vld [vmem:[%s0 + $0x3c] sm:$0xf]
  %v24 = vld [vmem:[%s0 + $0x40] sm:$0xf]
  %v25 = vld [vmem:[%s0 + $0x44] sm:$0xf]
  %v26 = vld [vmem:[%s0 + $0x48] sm:$0xf]
  %v27 = vld [vmem:[%s0 + $0x4c] sm:$0xf]
  %v28 = vld [vmem:[%s0 + $0x50] sm:$0xf]
  %v29 = vld [vmem:[%s0 + $0x54] sm:$0xf]
  %v30 = vld [vmem:[%s0 + $0x58] sm:$0xf]
  %v31 = vld [vmem:[%s0 + $0x5c] sm:$0xf]
  %v32 = vld [vmem:[%s0 + $0x60] sm:$0xf]
  %v33 = vld [vmem:[%s0 + $0x64] sm:$0xf]
  %v34 = vld [vmem:[%s0 + $0x68] sm:$0xf]
  %v35 = vld [vmem:[%s0 + $0x6c] sm:$0xf]
  %v36 = vld [vmem:[%s0 + $0x70] sm:$0xf]
  %v37 = vld [vmem:[%s0 + $0x74] sm:$0xf]
  %v38 = vld [vmem:[%s0 + $0x78] sm:$0xf]
  %v39 = vld [vmem:[%s0 + $0x7c] sm:$0xf]
  %v40 = vld [vmem:[%s0 + $0x80] sm:$0xf]
  %v41 = vld [vmem:[%s0 + $0x84] sm:$0xf]
  %v42 = vld [vmem:[%s0 + $0x88] sm:$0xf]
  %v43 = vld [vmem:[%s0 + $0x8c] sm:$0xf]
  %v44 = vld [vmem:[%s0 + $0x90] sm:$0xf]
  %v45 = vld [vmem:[%s0 + $0x94] sm:$0xf]
  %v46 = vld [vmem:[%s0 + $0x98] sm:$0xf]
  %v47 = vld [vmem:[%s0 + $0x9c] sm:$0xf]
  %v48 = vld [vmem:[%s0 + $0xa0] sm:$0xf]
  %v49 = vld [vmem:[%s0 + $0xa4] sm:$0xf]
  %v50 = vld [vmem:[%s0 + $0xa8] sm:$0xf]
  %v51 = vld [vmem:[%s0 + $0xac] sm:$0xf]
  %v52 = vld [vmem:[%s0 + $0xb0] sm:$0xf]
  %v53 = vld [vmem:[%s0 + $0xb4] sm:$0xf]
  %v54 = vld [vmem:[%s0 + $0xb8] sm:$0xf]
  %v55 = vld [vmem:[%s0 + $0xbc] sm:$0xf]
  %v56 = vld [vmem:[%s0 + $0xc0] sm:$0xf]
  %v57 = vld [vmem:[%s0 + $0xc4] sm:$0xf]
  %v58 = vld [vmem:[%s0 + $0xc8] sm:$0xf]
  %v59 = vld [vmem:[%s0 + $0xcc] sm:$0xf]
  %v60 = vld [vmem:[%s0 + $0xd0] sm:$0xf]
  %v61 = vld [vmem:[%s0 + $0xd4] sm:$0xf]
  %v62 = vld [vmem:[%s0 + $0xd8] sm:$0xf]
  %v63 = vld [vmem:[%s0 + $0xdc] sm:$0xf]
  %v64 = vld [vmem:[%s0 + $0xe0] sm:$0xf]
  %v65 = vld [vmem:[%s0 + $0xe4] sm:$0xf]
  %v66 = vld [vmem:[%s0 + $0xe8] sm:$0xf]
  %v67 = vld [vmem:[%s0 + $0xec] sm:$0xf]
  %v68 = vld [vmem:[%s0 + $0xf0] sm:$0xf]
  %v69 = vld [vmem:[%s0 + $0xf4] sm:$0xf]
  %v70 = vld [vmem:[%s0 + $0xf8] sm:$0xf]
  %v71 = vld [vmem:[%s0 + $0xfc] sm:$0xf]
  %v72 = vadd.f32 %v8, %v9
  %v73 = vadd.f32 %v10, %v11
  %v74 = vadd.f32 %v12, %v13
  %v75 = vadd.f32 %v14, %v15
  %v76 = vadd.f32 %v16, %v17
  %v77 = vadd.f32 %v18, %v19
  %v78 = vadd.f32 %v20, %v21
  %v79 = vadd.f32 %v22, %v23
  %v80 = vadd.f32 %v24, %v25
  %v81 = vadd.f32 %v26, %v27
  %v82 = vadd.f32 %v28, %v29
  %v83 = vadd.f32 %v30, %v31
  %v84 = vadd.f32 %v32, %v33
  %v85 = vadd.f32 %v34, %v35
  %v86 = vadd.f32 %v36, %v37
  %v87 = vadd.f32 %v38, %v39
  %v88 = vadd.f32 %v40, %v41
  %v89 = vadd.f32 %v42, %v43
  %v90 = vadd.f32 %v44, %v45
  %v91 = vadd.f32 %v46, %v47
  %v92 = vadd.f32 %v48, %v49
  %v93 = vadd.f32 %v50, %v51
  %v94 = vadd.f32 %v52, %v53
  %v95 = vadd.f32 %v54, %v55
  %v96 = vadd.f32 %v56, %v57
  %v97 = vadd.f32 %v58, %v59
  %v98 = vadd.f32 %v60, %v61
  %v99 = vadd.f32 %v62, %v63
  %v100 = vadd.f32 %v64, %v65
  %v101 = vadd.f32 %v66, %v67
  %v102 = vadd.f32 %v68, %v69
  %v103 = vadd.f32 %v70, %v71
  %136 = vrot.lane.b32.xlu0 %v72, 124
  %v137 = vpop.permute.xlu0 %136
  %138 = vrot.lane.b32.xlu0 %v73, 124
  %v139 = vpop.permute.xlu0 %138
  %140 = vrot.lane.b32.xlu0 %v74, 124
  %v141 = vpop.permute.xlu0 %140
  %142 = vrot.lane.b32.xlu0 %v75, 124
  %v143 = vpop.permute.xlu0 %142
  %144 = vrot.lane.b32.xlu0 %v76, 124
  %v145 = vpop.permute.xlu0 %144
  %146 = vrot.lane.b32.xlu0 %v77, 124
  %v147 = vpop.permute.xlu0 %146
  %148 = vrot.lane.b32.xlu0 %v78, 124
  %v149 = vpop.permute.xlu0 %148
  %150 = vrot.lane.b32.xlu0 %v79, 124
  %v151 = vpop.permute.xlu0 %150
  %152 = vrot.lane.b32.xlu0 %v80, 124
  %v153 = vpop.permute.xlu0 %152
  %154 = vrot.lane.b32.xlu0 %v81, 124
  %v155 = vpop.permute.xlu0 %154
  %156 = vrot.lane.b32.xlu0 %v82, 124
  %v157 = vpop.permute.xlu0 %156
  %158 = vrot.lane.b32.xlu0 %v83, 124
  %v159 = vpop.permute.xlu0 %158
  %160 = vrot.lane.b32.xlu0 %v84, 124
  %v161 = vpop.permute.xlu0 %160
  %162 = vrot.lane.b32.xlu0 %v85, 124
  %v163 = vpop.permute.xlu0 %162
  %164 = vrot.lane.b32.xlu0 %v86, 124
  %v165 = vpop.permute.xlu0 %164
  %166 = vrot.lane.b32.xlu0 %v87, 124
  %v167 = vpop.permute.xlu0 %166
  %168 = vrot.lane.b32.xlu0 %v88, 124
  %v169 = vpop.permute.xlu0 %168
  %170 = vrot.lane.b32.xlu0 %v89, 124
  %v171 = vpop.permute.xlu0 %170
  %172 = vrot.lane.b32.xlu0 %v90, 124
  %v173 = vpop.permute.xlu0 %172
  %174 = vrot.lane.b32.xlu0 %v91, 124
  %v175 = vpop.permute.xlu0 %174
  %176 = vrot.lane.b32.xlu0 %v92, 124
  %v177 = vpop.permute.xlu0 %176
  %178 = vrot.lane.b32.xlu0 %v93, 124
  %v179 = vpop.permute.xlu0 %178
  %180 = vrot.lane.b32.xlu0 %v94, 124
  %v181 = vpop.permute.xlu0 %180
  %182 = vrot.lane.b32.xlu0 %v95, 124
  %v183 = vpop.permute.xlu0 %182
  %184 = vrot.lane.b32.xlu0 %v96, 124
  %v185 = vpop.permute.xlu0 %184
  %186 = vrot.lane.b32.xlu0 %v97, 124
  %v187 = vpop.permute.xlu0 %186
  %188 = vrot.lane.b32.xlu0 %v98, 124
  %v189 = vpop.permute.xlu0 %188
  %190 = vrot.lane.b32.xlu0 %v99, 124
  %v191 = vpop.permute.xlu0 %190
  %192 = vrot.lane.b32.xlu0 %v100, 124
  %v193 = vpop.permute.xlu0 %192
  %194 = vrot.lane.b32.xlu0 %v101, 124
  %v195 = vpop.permute.xlu0 %194
  %196 = vrot.lane.b32.xlu0 %v102, 124
  %v197 = vpop.permute.xlu0 %196
  %198 = vrot.lane.b32.xlu0 %v103, 124
  %v199 = vpop.permute.xlu0 %198
  %v232 = vadd.f32 %v72, %v137
  %v233 = vadd.f32 %v73, %v139
  %v234 = vadd.f32 %v74, %v141
  %v235 = vadd.f32 %v75, %v143
  %v236 = vadd.f32 %v76, %v145
  %v237 = vadd.f32 %v77, %v147
  %v238 = vadd.f32 %v78, %v149
  %v239 = vadd.f32 %v79, %v151
  %v240 = vadd.f32 %v80, %v153
  %v241 = vadd.f32 %v81, %v155
  %v242 = vadd.f32 %v82, %v157
  %v243 = vadd.f32 %v83, %v159
  %v244 = vadd.f32 %v84, %v161
  %v245 = vadd.f32 %v85, %v163
  %v246 = vadd.f32 %v86, %v165
  %v247 = vadd.f32 %v87, %v167
  %v248 = vadd.f32 %v88, %v169
  %v249 = vadd.f32 %v89, %v171
  %v250 = vadd.f32 %v90, %v173
  %v251 = vadd.f32 %v91, %v175
  %v252 = vadd.f32 %v92, %v177
  %v253 = vadd.f32 %v93, %v179
  %v254 = vadd.f32 %v94, %v181
  %v255 = vadd.f32 %v95, %v183
  %v256 = vadd.f32 %v96, %v185
  %v257 = vadd.f32 %v97, %v187
  %v258 = vadd.f32 %v98, %v189
  %v259 = vadd.f32 %v99, %v191
  %v260 = vadd.f32 %v100, %v193
  %v261 = vadd.f32 %v101, %v195
  %v262 = vadd.f32 %v102, %v197
  %v263 = vadd.f32 %v103, %v199
  %v264 = vmul.f32 %v232, 0.125
  %v265 = vmul.f32 %v233, 0.125
  %v266 = vmul.f32 %v234, 0.125
  %v267 = vmul.f32 %v235, 0.125
  %v268 = vmul.f32 %v236, 0.125
  %v269 = vmul.f32 %v237, 0.125
  %v270 = vmul.f32 %v238, 0.125
  %v271 = vmul.f32 %v239, 0.125
  %v272 = vmul.f32 %v240, 0.125
  %v273 = vmul.f32 %v241, 0.125
  %v274 = vmul.f32 %v242, 0.125
  %v275 = vmul.f32 %v243, 0.125
  %v276 = vmul.f32 %v244, 0.125
  %v277 = vmul.f32 %v245, 0.125
  %v278 = vmul.f32 %v246, 0.125
  %v279 = vmul.f32 %v247, 0.125
  %v280 = vmul.f32 %v248, 0.125
  %v281 = vmul.f32 %v249, 0.125
  %v282 = vmul.f32 %v250, 0.125
  %v283 = vmul.f32 %v251, 0.125
  %v284 = vmul.f32 %v252, 0.125
  %v285 = vmul.f32 %v253, 0.125
  %v286 = vmul.f32 %v254, 0.125
  %v287 = vmul.f32 %v255, 0.125
  %v288 = vmul.f32 %v256, 0.125
  %v289 = vmul.f32 %v257, 0.125
  %v290 = vmul.f32 %v258, 0.125
  %v291 = vmul.f32 %v259, 0.125
  %v292 = vmul.f32 %v260, 0.125
  %v293 = vmul.f32 %v261, 0.125
  %v294 = vmul.f32 %v262, 0.125
  %v295 = vmul.f32 %v263, 0.125
  %vm296 = vcmask 27648
  %297 = vst.msk [vmem:[%s1] sm:$0xf] %vm296, %v264
  %298 = vst.msk [vmem:[%s1 + $0x4] sm:$0xf] %vm296, %v265
  %299 = vst.msk [vmem:[%s1 + $0x8] sm:$0xf] %vm296, %v266
  %300 = vst.msk [vmem:[%s1 + $0xc] sm:$0xf] %vm296, %v267
  %301 = vst.msk [vmem:[%s1 + $0x10] sm:$0xf] %vm296, %v268
  %302 = vst.msk [vmem:[%s1 + $0x14] sm:$0xf] %vm296, %v269
  %303 = vst.msk [vmem:[%s1 + $0x18] sm:$0xf] %vm296, %v270
  %304 = vst.msk [vmem:[%s1 + $0x1c] sm:$0xf] %vm296, %v271
  %305 = vst.msk [vmem:[%s1 + $0x20] sm:$0xf] %vm296, %v272
  %306 = vst.msk [vmem:[%s1 + $0x24] sm:$0xf] %vm296, %v273
  %307 = vst.msk [vmem:[%s1 + $0x28] sm:$0xf] %vm296, %v274
  %308 = vst.msk [vmem:[%s1 + $0x2c] sm:$0xf] %vm296, %v275
  %309 = vst.msk [vmem:[%s1 + $0x30] sm:$0xf] %vm296, %v276
  %310 = vst.msk [vmem:[%s1 + $0x34] sm:$0xf] %vm296, %v277
  %311 = vst.msk [vmem:[%s1 + $0x38] sm:$0xf] %vm296, %v278
  %312 = vst.msk [vmem:[%s1 + $0x3c] sm:$0xf] %vm296, %v279
  %313 = vst.msk [vmem:[%s1 + $0x40] sm:$0xf] %vm296, %v280
  %314 = vst.msk [vmem:[%s1 + $0x44] sm:$0xf] %vm296, %v281
  %315 = vst.msk [vmem:[%s1 + $0x48] sm:$0xf] %vm296, %v282
  %316 = vst.msk [vmem:[%s1 + $0x4c] sm:$0xf] %vm296, %v283
  %317 = vst.msk [vmem:[%s1 + $0x50] sm:$0xf] %vm296, %v284
  %318 = vst.msk [vmem:[%s1 + $0x54] sm:$0xf] %vm296, %v285
  %319 = vst.msk [vmem:[%s1 + $0x58] sm:$0xf] %vm296, %v286
  %320 = vst.msk [vmem:[%s1 + $0x5c] sm:$0xf] %vm296, %v287
  %321 = vst.msk [vmem:[%s1 + $0x60] sm:$0xf] %vm296, %v288
  %322 = vst.msk [vmem:[%s1 + $0x64] sm:$0xf] %vm296, %v289
  %323 = vst.msk [vmem:[%s1 + $0x68] sm:$0xf] %vm296, %v290
  %324 = vst.msk [vmem:[%s1 + $0x6c] sm:$0xf] %vm296, %v291
  %325 = vst.msk [vmem:[%s1 + $0x70] sm:$0xf] %vm296, %v292
  %326 = vst.msk [vmem:[%s1 + $0x74] sm:$0xf] %vm296, %v293
  %327 = vst.msk [vmem:[%s1 + $0x78] sm:$0xf] %vm296, %v294
  %328 = vst.msk [vmem:[%s1 + $0x7c] sm:$0xf] %vm296, %v295
  // Predicated region
  $region6: #{tpu_custom_call.1} parent=0 // pred_check
    _
  $region7: #{tpu_custom_call.1} parent=0 // pred_check_branch
    %330 = sbr.rel (0) target = $region9
  $region8: #{tpu_custom_call.1} parent=0 // pred_region
    _
  $region9: #{tpu_custom_call.1} parent=0 // pred_fallthru
    _
  // Predicated region
  $region10: #{tpu_custom_call.1} parent=0 // pred_check
    _
  $region11: #{tpu_custom_call.1} parent=0 // pred_check_branch
    %332 = sbr.rel (0) target = $region13
  $region12: #{tpu_custom_call.1} parent=0 // pred_region
    _
  $region13: #{tpu_custom_call.1} parent=0 // pred_fallthru
    _

</llo_original>
